<compile_context>
chip_gen: v5e
topology: v5e:2x2
jax: 0.10.0
libtpu: 0.0.40
codegen_flags: <defaults>
</compile_context>

<pallas_src>
import functools

import jax
import jax.numpy as jnp
from jax.experimental import pallas as pl
from jax.experimental.pallas import tpu as pltpu

_SUBLANE = 8


def _round_up(v, m):
    return (v + m - 1) // m * m


def _step_vmem_bytes(tn, k, f_in, f_out, in_bytes, out_bytes):
    """Per-grid-step VMEM working set: double-buffered in/out blocks plus live
    f32 intermediates (neighbor matmul result, worst-case input reshape copy,
    f32 f_sum / x_out accumulators)."""
    rows = tn * k
    in_blk = (tn + rows) * f_in * in_bytes            # x tile + flat neighbor tile
    out_blk = (tn + rows) * f_out * out_bytes         # out_x tile + out_neigh tile
    interm = (rows * f_out * 4                        # f32 neighbor matmul result
              + rows * f_in * in_bytes                # reshape copy (only if K % 8 != 0)
              + tn * (f_in + f_out) * 4)              # f32 f_sum + x_out
    return 2 * (in_blk + out_blk) + interm            # 2x = double-buffered pipeline


def _choose_node_tile(n, k, f_in, f_out, in_bytes, out_bytes, budget_bytes):
    """Node tile targeting ~1K effective matmul rows per grid step (HBM roofline
    knee), shrunk until the per-step VMEM working set fits the budget."""
    tn = max(64, _round_up(max(1, 1024 // (k + 1)), _SUBLANE))
    tn = min(tn, _round_up(max(n, 1), _SUBLANE))
    tn = max(tn, _SUBLANE)
    while tn > _SUBLANE and _step_vmem_bytes(
            tn, k, f_in, f_out, in_bytes, out_bytes) > budget_bytes:
        tn -= _SUBLANE
    return tn


def _gcn_agg_kernel(x_ref, neigh_ref, wt_ref, out_x_ref, out_neigh_ref, *, k):
    tn, f_in = x_ref.shape
    wt = wt_ref[...]                                   # (F_in, F_out), resident tile
    neigh = neigh_ref[...]                             # (tn*k, F_in), node-major rows

    # All K neighbor rows of this node tile through one large-M MXU matmul,
    # f32 accumulation, stored straight back (this is the largest HBM stream).
    out_neigh_ref[...] = jnp.dot(
        neigh, wt, preferred_element_type=jnp.float32).astype(out_neigh_ref.dtype)

    # Per-node neighbor mean on the input side (torch order: mean -> add -> linear).
    # The (tn, k, F_in) reshape is layout-free when k % 8 == 0; otherwise it may
    # copy the (small, compute-dtype) input tile -- never the f32 matmul output.
    f_sum = jnp.sum(neigh.reshape(tn, k, f_in), axis=1, dtype=jnp.float32)
    x_plus_f = x_ref[...].astype(jnp.float32) + f_sum * (1.0 / k)
    out_x_ref[...] = jnp.dot(
        x_plus_f.astype(wt.dtype), wt,
        preferred_element_type=jnp.float32).astype(out_x_ref.dtype)


def gcn_aggregator(x, neighbor, weight, *, compute_dtype=None, out_dtype=None):
    """x: (N, F_in); neighbor: stacked (N, K, F_in) array or list of N (K, F_in)
    arrays; weight: (F_out, F_in) as in nn.Linear(in, out, bias=False).
    Returns (out_x (N, F_out), out_neigh (N, K, F_out))."""
    # TODO(synk): ragged neighbor lists (unequal K per node) would need padding +
    # a per-node count vector via scalar prefetch; only the dense case is handled.
    neigh = jnp.stack(neighbor, axis=0) if isinstance(neighbor, (list, tuple)) else neighbor
    N, K, F_in = neigh.shape
    F_out = weight.shape[0]
    if K == 0:
        raise ValueError("gcn_aggregator requires at least one neighbor per node")
    if compute_dtype is None:
        compute_dtype = x.dtype
    if out_dtype is None:
        out_dtype = x.dtype

    in_bytes = jnp.dtype(compute_dtype).itemsize
    out_bytes = jnp.dtype(out_dtype).itemsize

    # Per-generation VMEM budget (64 MiB/TC on v7x, 128 MiB on v5e/v6e).
    try:
        vmem_cap = int(pltpu.get_tpu_info().vmem_capacity_bytes)
    except Exception:
        vmem_cap = 64 * 1024 * 1024  # conservative (v7x per-TC) fallback
    wt_bytes = F_in * F_out * in_bytes
    step_budget = max(4 * 1024 * 1024,
                      min(vmem_cap // 2, 40 * 1024 * 1024) - 2 * wt_bytes)

    TN = _choose_node_tile(N, K, F_in, F_out, in_bytes, out_bytes, step_budget)
    n_tiles = pl.cdiv(N, TN)
    rows = TN * K

    step_est = _step_vmem_bytes(TN, K, F_in, F_out, in_bytes, out_bytes)
    vmem_limit = int(min(vmem_cap * 3 // 4,
                         max(32 * 1024 * 1024, 2 * (step_est + 2 * wt_bytes))))

    # Wrapper plumbing is cheap: dtype casts only if requested, a tiny
    # (F_out, F_in) -> (F_in, F_out) weight transpose, and metadata-only
    # reshapes of the contiguous neighbor tensor.  No pads, no output slicing.
    x_c = x.astype(compute_dtype)
    neigh_flat = neigh.reshape(N * K, F_in).astype(compute_dtype)
    wt = weight.T.astype(compute_dtype)                # (F_in, F_out)

    kernel = functools.partial(_gcn_agg_kernel, k=K)
    out_x, out_neigh = pl.pallas_call(
        kernel,
        out_shape=(
            jax.ShapeDtypeStruct((N, F_out), out_dtype),
            jax.ShapeDtypeStruct((N * K, F_out), out_dtype),
        ),
        grid_spec=pltpu.PrefetchScalarGridSpec(
            num_scalar_prefetch=0,
            grid=(n_tiles,),
            in_specs=[
                pl.BlockSpec((TN, F_in), lambda i: (i, 0)),        # x tile
                pl.BlockSpec((rows, F_in), lambda i: (i, 0)),      # flat neighbor tile
                # Resident weight (constant index_map, fetched once).
                # TODO(synk): pipeline_mode=pl.Buffered(1) would single-buffer it;
                # only worth it when F_in*F_out reaches multi-MiB sizes.
                pl.BlockSpec((F_in, F_out), lambda i: (0, 0)),
            ],
            out_specs=(
                pl.BlockSpec((TN, F_out), lambda i: (i, 0)),
                pl.BlockSpec((rows, F_out), lambda i: (i, 0)),
            ),
        ),
        compiler_params=pltpu.CompilerParams(
            # "parallel" lets the node-tile axis shard across v7x's 2 TensorCores;
            # neutral on single-TC v5e/v6e.
            dimension_semantics=("parallel",),
            vmem_limit_bytes=vmem_limit,
        ),
    )(x_c, neigh_flat, wt)

    return out_x, out_neigh.reshape(N, K, F_out)


if __name__ == "__main__":
    N, K, F_in, F_out = 8, 8, 32, 32

    key = jax.random.PRNGKey(0)
    kx, kn, kw = jax.random.split(key, 3)

    x = jax.random.normal(kx, (N, F_in), dtype=jnp.float32)
    neigh_stack = jax.random.normal(kn, (N, K, F_in), dtype=jnp.float32)
    neighbor_list = [neigh_stack[i] for i in range(N)]

    # nn.Linear-style U(-1/sqrt(in), 1/sqrt(in)) init, no bias.
    bound = 1.0 / (F_in ** 0.5)
    weight = jax.random.uniform(kw, (F_out, F_in), dtype=jnp.float32,
                                minval=-bound, maxval=bound)

    # f32 path (matches the PyTorch module's numerics).
    out_x, out_neigh = gcn_aggregator(x, neighbor_list, weight)
    jax.block_until_ready((out_x, out_neigh))

    # Pure-JAX reference.
    f_ref = neigh_stack.mean(axis=1)
    ref_x = (x + f_ref) @ weight.T
    ref_neigh = jnp.einsum("nkf,of->nko", neigh_stack, weight)

    assert out_x.shape == (N, F_out) and out_neigh.shape == (N, K, F_out)
    assert jnp.allclose(out_x, ref_x, atol=1e-4, rtol=1e-4)
    assert jnp.allclose(out_neigh, ref_neigh, atol=1e-4, rtol=1e-4)

    # bf16 compute path (halves HBM read traffic; f32 accumulation in-kernel).
    out_x_bf, out_neigh_bf = gcn_aggregator(x, neigh_stack, weight,
                                            compute_dtype=jnp.bfloat16)
    jax.block_until_ready((out_x_bf, out_neigh_bf))
    assert jnp.allclose(out_x_bf, ref_x, atol=1e-1, rtol=1e-1)
    assert jnp.allclose(out_neigh_bf, ref_neigh, atol=1e-1, rtol=1e-1)

    print("KERNEL_OK")
</pallas_src>

<mosaic_0001>
module attributes {stable_mosaic.version = 11 : i64} {
  func.func @_gcn_agg_kernel(%arg0: i32, %arg1: memref<8x32xf32, #tpu.memory_space<vmem>>, %arg2: memref<64x32xf32, #tpu.memory_space<vmem>>, %arg3: memref<32x32xf32, #tpu.memory_space<vmem>>, %arg4: memref<8x32xf32, #tpu.memory_space<vmem>>, %arg5: memref<64x32xf32, #tpu.memory_space<vmem>>) attributes {dimension_semantics = [#tpu.dimension_semantics<parallel>], iteration_bounds = array<i64: 1>, scalar_prefetch = 0 : i64, scratch_operands = 0 : i64, tpu.core_type = #tpu.core_type<tc>, window_params = [{transform_indices = @transform_0, window_bounds = array<i64: 8, 32>}, {transform_indices = @transform_1, window_bounds = array<i64: 64, 32>}, {pipeline_mode = #tpu.pipeline_mode<synchronous>, transform_indices = @transform_2, window_bounds = array<i64: 32, 32>}, {transform_indices = @transform_3, window_bounds = array<i64: 8, 32>}, {transform_indices = @transform_4, window_bounds = array<i64: 64, 32>}]} {
    %c0 = arith.constant 0 : index
    %c0_0 = arith.constant 0 : index
    %0 = vector.load %arg3[%c0, %c0_0] : memref<32x32xf32, #tpu.memory_space<vmem>>, vector<32x32xf32>
    %c0_1 = arith.constant 0 : index
    %c0_2 = arith.constant 0 : index
    %1 = vector.load %arg2[%c0_1, %c0_2] : memref<64x32xf32, #tpu.memory_space<vmem>>, vector<64x32xf32>
    %cst = arith.constant dense<0.000000e+00> : vector<64x32xf32>
    %2 = tpu.matmul %1, %0, %cst {dimension_numbers = #tpu.dot_dimension_numbers<[1], [0], [0], [1], [0, 0, 1, 1], [], []>} : vector<64x32xf32>, vector<32x32xf32>, vector<64x32xf32> -> vector<64x32xf32>
    %c0_3 = arith.constant 0 : index
    %c0_4 = arith.constant 0 : index
    %3 = vector.load %arg5[%c0_3, %c0_4] : memref<64x32xf32, #tpu.memory_space<vmem>>, vector<64x32xf32>
    tpu.vector_store %arg5[%c0_3, %c0_4], %2 {strides = array<i32>} : memref<64x32xf32, #tpu.memory_space<vmem>>, vector<64x32xf32>,
    %4 = vector.shape_cast %1 : vector<64x32xf32> to vector<8x8x32xf32>
    %cst_5 = arith.constant dense<0.000000e+00> : vector<8x32xf32>
    %5 = vector.multi_reduction <add>, %4, %cst_5 [1] : vector<8x8x32xf32> to vector<8x32xf32>
    %c0_6 = arith.constant 0 : index
    %c0_7 = arith.constant 0 : index
    %6 = vector.load %arg1[%c0_6, %c0_7] : memref<8x32xf32, #tpu.memory_space<vmem>>, vector<8x32xf32>
    %cst_8 = arith.constant 1.250000e-01 : f32
    %7 = vector.broadcast %cst_8 : f32 to vector<8x32xf32>
    %8 = arith.mulf %5, %7 : vector<8x32xf32>
    %9 = arith.addf %6, %8 : vector<8x32xf32>
    %cst_9 = arith.constant dense<0.000000e+00> : vector<8x32xf32>
    %10 = tpu.matmul %9, %0, %cst_9 {dimension_numbers = #tpu.dot_dimension_numbers<[1], [0], [0], [1], [0, 0, 1, 1], [], []>} : vector<8x32xf32>, vector<32x32xf32>, vector<8x32xf32> -> vector<8x32xf32>
    %c0_10 = arith.constant 0 : index
    %c0_11 = arith.constant 0 : index
    %11 = vector.load %arg4[%c0_10, %c0_11] : memref<8x32xf32, #tpu.memory_space<vmem>>, vector<8x32xf32>
    tpu.vector_store %arg4[%c0_10, %c0_11], %10 {strides = array<i32>} : memref<8x32xf32, #tpu.memory_space<vmem>>, vector<8x32xf32>,
    return
  }
  func.func @transform_0(%arg0: i32) -> (i32, i32) {
    %c0_i32 = arith.constant 0 : i32
    %c0_i32_0 = arith.constant 0 : i32
    return %arg0, %c0_i32 : i32, i32
  }
  func.func @transform_1(%arg0: i32) -> (i32, i32) {
    %c0_i32 = arith.constant 0 : i32
    %c0_i32_0 = arith.constant 0 : i32
    return %arg0, %c0_i32 : i32, i32
  }
  func.func @transform_2(%arg0: i32) -> (i32, i32) {
    %c0_i32 = arith.constant 0 : i32
    %c0_i32_0 = arith.constant 0 : i32
    %c0_i32_1 = arith.constant 0 : i32
    return %c0_i32, %c0_i32_0 : i32, i32
  }
  func.func @transform_3(%arg0: i32) -> (i32, i32) {
    %c0_i32 = arith.constant 0 : i32
    %c0_i32_0 = arith.constant 0 : i32
    return %arg0, %c0_i32 : i32, i32
  }
  func.func @transform_4(%arg0: i32) -> (i32, i32) {
    %c0_i32 = arith.constant 0 : i32
    %c0_i32_0 = arith.constant 0 : i32
    return %arg0, %c0_i32 : i32, i32
  }
}

</mosaic_0001>

<llo_original>
// kernel: tpu_custom_call.1
$region0: #{tpu_custom_call.1}
  #allocation0 [shape = 'u32[]', space=smem, size = 0x4, offset = 0x4, fixed_abs, tag = 'smem constant byte address 0x4 - core index']
  #allocation1 [shape = 'u32[72,128]{1,0:T(1,128)}', space=vmem, size = 0x9000, scoped, tag = 'internal scratch']
  %s0 = inlined_call_operand.vmem [shape: f32[8,32], index: 0, kind: input, shape index: {}]
  %s1 = inlined_call_operand.vmem [shape: f32[64,32], index: 1, kind: input, shape index: {}]
  %s2 = inlined_call_operand.vmem [shape: f32[32,32], index: 2, kind: input, shape index: {}]
  %s3 = inlined_call_operand.hbm [shape: f32[8,32], index: 3, kind: output, shape index: {0}]
  %s4 = inlined_call_operand.vmem [shape: f32[64,32], index: 4, kind: output, shape index: {1}]
  %5 = xla_tuple %s3, %s4
  %s6 = sld [smem:[#allocation0]]
  $region30: #{tpu_custom_call.1} parent=0
    _
  %s8 = ssub.s32 1, %s6
  %s9 = scalar_select 0, %s8, %s6
  $region1: #{tpu_custom_call.1} parent=0
    #allocation2 [shape = 'u8[4096]{0}', space=vmem, size = 0x1000, scoped, tag = 'output window, operand 0, single buffered']
    #allocation3 [shape = 's32[1]{0}', space=sflag, size = 0x4, scoped, tag = 'scoped memory for tpu_custom_call.1']
    %10 = vsyncpa [#allocation3], 0
    // Predicated region
    $region2: #{tpu_custom_call.1} parent=1 // pred_check
      _
    $region3: #{tpu_custom_call.1} parent=1 // pred_check_branch
      %12 = sbr.rel (0) target = $region5
    $region4: #{tpu_custom_call.1} parent=1 // pred_region
      _
    $region5: #{tpu_custom_call.1} parent=1 // pred_fallthru
      _
    // Predicated region
    $region6: #{tpu_custom_call.1} parent=1 // pred_check
      _
    $region7: #{tpu_custom_call.1} parent=1 // pred_check_branch
      %14 = sbr.rel (0) target = $region9
    $region8: #{tpu_custom_call.1} parent=1 // pred_region
      _
    $region9: #{tpu_custom_call.1} parent=1 // pred_fallthru
      _
    // Predicated region
    $region10: #{tpu_custom_call.1} parent=1 // pred_check
      _
    $region11: #{tpu_custom_call.1} parent=1 // pred_check_branch
      %16 = sbr.rel (0) target = $region13
    $region12: #{tpu_custom_call.1} parent=1 // pred_region
      _
    $region13: #{tpu_custom_call.1} parent=1 // pred_fallthru
      _
    %v17 = vld [vmem:[%s2] sm:$0xff]
    %v18 = vld [vmem:[%s2 + $0x8] sm:$0xff]
    %v19 = vld [vmem:[%s2 + $0x10] sm:$0xff]
    %v20 = vld [vmem:[%s2 + $0x18] sm:$0xff]
    %v21 = vld [vmem:[%s1] sm:$0xff]
    %v22 = vld [vmem:[%s1 + $0x8] sm:$0xff]
    %v23 = vld [vmem:[%s1 + $0x10] sm:$0xff]
    %v24 = vld [vmem:[%s1 + $0x18] sm:$0xff]
    %v25 = vld [vmem:[%s1 + $0x20] sm:$0xff]
    %v26 = vld [vmem:[%s1 + $0x28] sm:$0xff]
    %v27 = vld [vmem:[%s1 + $0x30] sm:$0xff]
    %v28 = vld [vmem:[%s1 + $0x38] sm:$0xff]
    %vm29 = vcmask 261120
    %v31 = vsel %vm29, %v21, 0
    %v34 = vsel %vm29, %v22, 0
    %v37 = vsel %vm29, %v23, 0
    %v40 = vsel %vm29, %v24, 0
    %v43 = vsel %vm29, %v25, 0
    %v46 = vsel %vm29, %v26, 0
    %v49 = vsel %vm29, %v27, 0
    %v52 = vsel %vm29, %v28, 0
    %54 = vmatpush.msra.mxu0 0.0
    %55 = vmatpush.msra.mxu0 0.0
    %56 = vmatpush.msra.mxu0 0.0
    %57 = vmatpush.msra.mxu0 0.0
    %58 = vmatpush.msra.mxu0 0.0
    %59 = vmatpush.msra.mxu0 0.0
    %60 = vmatpush.msra.mxu0 0.0
    %61 = vmatpush.msra.mxu0 0.0
    %62 = vmatpush.msra.mxu0 0.0
    %63 = vmatpush.msra.mxu0 0.0
    %64 = vmatpush.msra.mxu0 0.0
    %65 = vmatpush.msra.mxu0 0.0
    %66 = vmatpush.msra.mxu0 %v20
    %67 = vmatpush.msra.mxu0 %v19
    %68 = vmatpush.msra.mxu0 %v18
    %69 = vmatpush.msra.mxu0 %v17
    %70 = vmatmul.f32.gmra.mxu0 %v31
    %v71 = vpop.f32.mrf.mxu0
    %v72 = vadd.f32 0.0, %v71
    %73 = vmatmul.f32.gmra.mxu0 %v34
    %v74 = vpop.f32.mrf.mxu0
    %v75 = vadd.f32 0.0, %v74
    %76 = vmatmul.f32.gmra.mxu0 %v37
    %v77 = vpop.f32.mrf.mxu0
    %v78 = vadd.f32 0.0, %v77
    %79 = vmatmul.f32.gmra.mxu0 %v40
    %v80 = vpop.f32.mrf.mxu0
    %v81 = vadd.f32 0.0, %v80
    %82 = vmatmul.f32.gmra.mxu0 %v43
    %v83 = vpop.f32.mrf.mxu0
    %v84 = vadd.f32 0.0, %v83
    %85 = vmatmul.f32.gmra.mxu0 %v46
    %v86 = vpop.f32.mrf.mxu0
    %v87 = vadd.f32 0.0, %v86
    %88 = vmatmul.f32.gmra.mxu0 %v49
    %v89 = vpop.f32.mrf.mxu0
    %v90 = vadd.f32 0.0, %v89
    %91 = vmatmul.f32.gmra.mxu0 %v52
    %v92 = vpop.f32.mrf.mxu0
    %v93 = vadd.f32 0.0, %v92
    %94 = vdwg.mxu0
    %95 = vst.msk [vmem:[%s4] sm:$0xff] %vm29, %v72
    %96 = vst.msk [vmem:[%s4 + $0x8] sm:$0xff] %vm29, %v75
    %97 = vst.msk [vmem:[%s4 + $0x10] sm:$0xff] %vm29, %v78
    %98 = vst.msk [vmem:[%s4 + $0x18] sm:$0xff] %vm29, %v81
    %99 = vst.msk [vmem:[%s4 + $0x20] sm:$0xff] %vm29, %v84
    %100 = vst.msk [vmem:[%s4 + $0x28] sm:$0xff] %vm29, %v87
    %101 = vst.msk [vmem:[%s4 + $0x30] sm:$0xff] %vm29, %v90
    %102 = vst.msk [vmem:[%s4 + $0x38] sm:$0xff] %vm29, %v93
    %v103 = vsel %vm29, %v21, 0.0
    %v104 = vrot.slane %v103, 4
    %v105 = vadd.f32 %v103, %v104
    %v106 = vrot.slane %v105, 2
    %v107 = vadd.f32 %v105, %v106
    %v108 = vrot.slane %v107, 1
    %v109 = vadd.f32 %v107, %v108
    %v110 = vsel %vm29, %v22, 0.0
    %v111 = vrot.slane %v110, 4
    %v112 = vadd.f32 %v110, %v111
    %v113 = vrot.slane %v112, 2
    %v114 = vadd.f32 %v112, %v113
    %v115 = vrot.slane %v114, 1
    %v116 = vadd.f32 %v114, %v115
    %v117 = vsel %vm29, %v23, 0.0
    %v118 = vrot.slane %v117, 4
    %v119 = vadd.f32 %v117, %v118
    %v120 = vrot.slane %v119, 2
    %v121 = vadd.f32 %v119, %v120
    %v122 = vrot.slane %v121, 1
    %v123 = vadd.f32 %v121, %v122
    %v124 = vsel %vm29, %v24, 0.0
    %v125 = vrot.slane %v124, 4
    %v126 = vadd.f32 %v124, %v125
    %v127 = vrot.slane %v126, 2
    %v128 = vadd.f32 %v126, %v127
    %v129 = vrot.slane %v128, 1
    %v130 = vadd.f32 %v128, %v129
    %v131 = vsel %vm29, %v25, 0.0
    %v132 = vrot.slane %v131, 4
    %v133 = vadd.f32 %v131, %v132
    %v134 = vrot.slane %v133, 2
    %v135 = vadd.f32 %v133, %v134
    %v136 = vrot.slane %v135, 1
    %v137 = vadd.f32 %v135, %v136
    %v138 = vsel %vm29, %v26, 0.0
    %v139 = vrot.slane %v138, 4
    %v140 = vadd.f32 %v138, %v139
    %v141 = vrot.slane %v140, 2
    %v142 = vadd.f32 %v140, %v141
    %v143 = vrot.slane %v142, 1
    %v144 = vadd.f32 %v142, %v143
    %v145 = vsel %vm29, %v27, 0.0
    %v146 = vrot.slane %v145, 4
    %v147 = vadd.f32 %v145, %v146
    %v148 = vrot.slane %v147, 2
    %v149 = vadd.f32 %v147, %v148
    %v150 = vrot.slane %v149, 1
    %v151 = vadd.f32 %v149, %v150
    %v152 = vsel %vm29, %v28, 0.0
    %v153 = vrot.slane %v152, 4
    %v154 = vadd.f32 %v152, %v153
    %v155 = vrot.slane %v154, 2
    %v156 = vadd.f32 %v154, %v155
    %v157 = vrot.slane %v156, 1
    %v158 = vadd.f32 %v156, %v157
    %v159 = vld [vmem:[%s0] sm:$0xff]
    %v160 = vmul.f32 %v109, 0.125
    %v161 = vmul.f32 %v116, 0.125
    %v162 = vmul.f32 %v123, 0.125
    %v163 = vmul.f32 %v130, 0.125
    %v164 = vmul.f32 %v137, 0.125
    %v165 = vmul.f32 %v144, 0.125
    %v166 = vmul.f32 %v151, 0.125
    %v167 = vmul.f32 %v158, 0.125
    %vm176 = vcmask 1041409
    %v177 = vsel %vm176, %v161, %v160
    %vm178 = vcmask 1042434
    %v179 = vsel %vm178, %v162, %v177
    %vm180 = vcmask 1043459
    %v181 = vsel %vm180, %v163, %v179
    %vm182 = vcmask 1044484
    %v183 = vsel %vm182, %v164, %v181
    %vm184 = vcmask 1045509
    %v185 = vsel %vm184, %v165, %v183
    %vm186 = vcmask 1046534
    %v187 = vsel %vm186, %v166, %v185
    %vm188 = vcmask 1047559
    %v189 = vsel %vm188, %v167, %v187
    %v191 = vadd.f32 %v159, %v189
    %v193 = vsel %vm29, %v191, 0
    %195 = vmatpush.msra.mxu0 0.0
    %196 = vmatpush.msra.mxu0 0.0
    %197 = vmatpush.msra.mxu0 0.0
    %198 = vmatpush.msra.mxu0 0.0
    %199 = vmatpush.msra.mxu0 0.0
    %200 = vmatpush.msra.mxu0 0.0
    %201 = vmatpush.msra.mxu0 0.0
    %202 = vmatpush.msra.mxu0 0.0
    %203 = vmatpush.msra.mxu0 0.0
    %204 = vmatpush.msra.mxu0 0.0
    %205 = vmatpush.msra.mxu0 0.0
    %206 = vmatpush.msra.mxu0 0.0
    %207 = vmatpush.msra.mxu0 %v20
    %208 = vmatpush.msra.mxu0 %v19
    %209 = vmatpush.msra.mxu0 %v18
    %210 = vmatpush.msra.mxu0 %v17
    %211 = vmatmul.f32.gmra.mxu0 %v193
    %v212 = vpop.f32.mrf.mxu0
    %v213 = vadd.f32 0.0, %v212
    %214 = vdwg.mxu0
    %215 = vst.msk [vmem:[#allocation2] sm:$0xff] %vm29, %v213
    // Predicated region
    $region14: #{tpu_custom_call.1} parent=1 // pred_check
      _
    $region15: #{tpu_custom_call.1} parent=1 // pred_check_branch
      %217 = sbr.rel (0) target = $region17
    $region16: #{tpu_custom_call.1} parent=1 // pred_region
      %219 = vsyncadd [#allocation3], 0
      %s221 = sshll.u32 [#allocation2], 4
      %s222 = int_to_ptr.vmem [resolvable:$true] %s221
      %s223 = sshll.u32 %s3, 4
      %s224 = int_to_ptr.hbm [resolvable:$true] %s223
      %226 = dma.vmem_to_hbm [thread:$0]  %s222, 128, %s224, [#allocation3]
    $region17: #{tpu_custom_call.1} parent=1 // pred_fallthru
      _
    // Predicated region
    $region18: #{tpu_custom_call.1} parent=1 // pred_check
      _
    $region19: #{tpu_custom_call.1} parent=1 // pred_check_branch
      %228 = sbr.rel (0) target = $region21
    $region20: #{tpu_custom_call.1} parent=1 // pred_region
      _
    $region21: #{tpu_custom_call.1} parent=1 // pred_fallthru
      _
    // Predicated region
    $region22: #{tpu_custom_call.1} parent=1 // pred_check
      _
    $region23: #{tpu_custom_call.1} parent=1 // pred_check_branch
      %230 = sbr.rel (0) target = $region25
    $region24: #{tpu_custom_call.1} parent=1 // pred_region
      %232 = dma.done [#allocation3], 128
    $region25: #{tpu_custom_call.1} parent=1 // pred_fallthru
      _
    // Predicated region
    $region26: #{tpu_custom_call.1} parent=1 // pred_check
      _
    $region27: #{tpu_custom_call.1} parent=1 // pred_check_branch
      %234 = sbr.rel (0) target = $region29
    $region28: #{tpu_custom_call.1} parent=1 // pred_region
      _
    $region29: #{tpu_custom_call.1} parent=1 // pred_fallthru
      _
    %235 = vsyncpa [#allocation3], 1

</llo_original>
